<compile_context>
chip_gen: v7x
topology: tpu7x:2x2x1
jax: 0.10.0
libtpu: 0.0.40
codegen_flags: <defaults>
</compile_context>

<pallas_src>
import jax
import jax.numpy as jnp
from jax.experimental import pallas as pl
from jax.experimental.pallas import tpu as pltpu

KH = KW = 3        # conv1: kernel_size=3, padding=1, stride=1
SA_K = 7           # SpatialAttention kernel_size=7, padding=3
SA_C = SA_K // 2   # only the centre tap touches a 1x1 (pad=3) input


def _sigmoid(z):
    # explicit formula (exp -> EUP slot); avoids relying on lax.logistic lowering
    return 1.0 / (1.0 + jnp.exp(-z))


def cbam_kernel(p_ref, w_ref, b_ref, w1_ref, w2_ref, saw_ref, ca_ref, out_ref):
    """One batch element per grid step.

    p_ref:   (1, H*W, KH*KW*Cin)  bf16 im2col patches for this image
    w_ref:   (KH*KW*Cin, Cout)    bf16 conv weights (BN-folded, im2col layout)
    b_ref:   (1, Cout)            f32 conv bias (BN-folded)
    w1_ref:  (Cout, Chid)         ChannelAttention fc1 weight (transposed)
    w2_ref:  (Chid, Cout)         ChannelAttention fc2 weight (transposed)
    saw_ref: (1, 2)               centre taps of the 7x7 spatial-attention conv
    ca_ref:  (1, 1, Cout)         channel-attention map (for validation)
    out_ref: (1, 1, 128)          final spatial-attention scalar, lane-broadcast
    """
    # conv1 (+ folded BN) as one MXU matmul: (H*W, 9*Cin) @ (9*Cin, Cout),
    # bf16 inputs, f32 accumulation; then bias + ReLU.
    y = jnp.dot(p_ref[0], w_ref[...], preferred_element_type=jnp.float32)
    y = jnp.maximum(y + b_ref[...], 0.0)               # (H*W, Cout) in VMEM only

    # ---- ChannelAttention: AdaptiveAvg/MaxPool2d(1) over spatial positions.
    avg_p = jnp.mean(y, axis=0, keepdims=True)          # (1, Cout)
    max_p = jnp.max(y, axis=0, keepdims=True)           # (1, Cout)

    def mlp(v):                                          # fc2(relu(fc1(v))), no bias
        h = jnp.maximum(
            jnp.dot(v, w1_ref[...], preferred_element_type=jnp.float32), 0.0)
        return jnp.dot(h, w2_ref[...], preferred_element_type=jnp.float32)

    ca = _sigmoid(mlp(avg_p) + mlp(max_p))               # (1, Cout)
    ca_ref[0] = ca

    # ---- SpatialAttention on the (Cout, 1, 1) channel-attention map:
    # channel mean/max -> 7x7 conv (only the centre tap hits a 1x1, pad=3 input)
    # -> sigmoid.
    c_mean = jnp.mean(ca, axis=1, keepdims=True)         # (1, 1)
    c_max = jnp.max(ca, axis=1, keepdims=True)           # (1, 1)
    saw = saw_ref[...]                                    # (1, 2)
    sa = c_mean * saw[:, 0:1] + c_max * saw[:, 1:2]       # (1, 1)
    out_ref[0] = jnp.broadcast_to(_sigmoid(sa), (1, 128))  # lane-dense store


def cbam_forward(x_nchw, conv_w, conv_b, gamma, beta, run_mean, run_var,
                 fc1_w, fc2_w, sa_w, eps=1e-5):
    """Forward pass equivalent to CBAMBlock.forward (eval-mode BN).

    x_nchw: (N, Cin, H, W)        conv_w: (Cout, Cin, 3, 3)   conv_b: (Cout,)
    gamma/beta/run_mean/run_var: (Cout,)   BatchNorm2d(out_ch) params/stats
    fc1_w: (Chid, Cout, 1, 1)     fc2_w: (Cout, Chid, 1, 1)   (no bias)
    sa_w:  (1, 2, 7, 7)           SpatialAttention conv (no bias)

    Returns (out, ca): out is (N, 1, 1, 1) -- the module's return value;
    ca (N, Cout) is the intermediate channel-attention map (for validation).
    """
    x = jnp.transpose(x_nchw, (0, 2, 3, 1)).astype(jnp.float32)    # NCHW -> NHWC
    N, H, W, Cin = x.shape
    Cout = conv_w.shape[0]
    Chid = fc1_w.shape[0]
    K = KH * KW * Cin

    # Fold eval-mode BN (applied AFTER conv1) into the conv weights / bias:
    #   bn(conv(x)+b) = conv(x)*s + (b - mean)*s + beta,  s = gamma/sqrt(var+eps)
    s = gamma / jnp.sqrt(run_var + eps)
    w_fold = conv_w * s[:, None, None, None]                        # (Cout,Cin,3,3)
    b_fold = (conv_b - run_mean) * s + beta                         # (Cout,)

    # OIHW -> HWIO -> (KH*KW*Cin, Cout) im2col weight matrix.
    w_mat = jnp.transpose(w_fold, (2, 3, 1, 0)).reshape(K, Cout)

    # im2col patches (layout plumbing, done once in XLA): order (kh, kw, ci)
    # matches w_mat above.  Shape (N, H*W, 9*Cin).
    x_pad = jnp.pad(x, ((0, 0), (1, 1), (1, 1), (0, 0)))
    patches = jnp.concatenate(
        [x_pad[:, kh:kh + H, kw:kw + W, :] for kh in range(KH) for kw in range(KW)],
        axis=-1).reshape(N, H * W, K)

    w1m = fc1_w[:, :, 0, 0].T                                       # (Cout, Chid)
    w2m = fc2_w[:, :, 0, 0].T                                       # (Chid, Cout)
    sa_center = sa_w[0, :, SA_C, SA_C].reshape(1, 2)                # centre taps

    ca, out = pl.pallas_call(
        cbam_kernel,
        out_shape=(jax.ShapeDtypeStruct((N, 1, Cout), jnp.float32),
                   jax.ShapeDtypeStruct((N, 1, 128), jnp.float32)),
        grid_spec=pltpu.PrefetchScalarGridSpec(
            num_scalar_prefetch=0,
            grid=(N,),
            in_specs=[
                pl.BlockSpec((1, H * W, K), lambda n: (n, 0, 0)),
                pl.BlockSpec((K, Cout), lambda n: (0, 0)),
                pl.BlockSpec((1, Cout), lambda n: (0, 0)),
                pl.BlockSpec((Cout, Chid), lambda n: (0, 0)),
                pl.BlockSpec((Chid, Cout), lambda n: (0, 0)),
                pl.BlockSpec((1, 2), lambda n: (0, 0)),
            ],
            out_specs=[
                pl.BlockSpec((1, 1, Cout), lambda n: (n, 0, 0)),
                pl.BlockSpec((1, 1, 128), lambda n: (n, 0, 0)),
            ],
        ),
        compiler_params=pltpu.CompilerParams(
            dimension_semantics=("parallel",)),   # independent images -> megacore
    )(patches.astype(jnp.bfloat16),
      w_mat.astype(jnp.bfloat16),
      b_fold.reshape(1, Cout).astype(jnp.float32),
      w1m.astype(jnp.float32),
      w2m.astype(jnp.float32),
      sa_center.astype(jnp.float32))

    out_nchw = out[:, 0, 0].reshape(N, 1, 1, 1)       # module's return value
    return out_nchw, ca[:, 0, :]


def cbam_reference(x, conv_w, conv_b, gamma, beta, run_mean, run_var,
                   fc1_w, fc2_w, sa_w, eps=1e-5):
    """Pure-JAX reference of CBAMBlock.forward (eval-mode BN)."""
    y = jax.lax.conv_general_dilated(
        x, conv_w, window_strides=(1, 1), padding=((1, 1), (1, 1)),
        dimension_numbers=("NCHW", "OIHW", "NCHW")) + conv_b[None, :, None, None]
    y = (y - run_mean[None, :, None, None]) / jnp.sqrt(
        run_var[None, :, None, None] + eps)
    y = y * gamma[None, :, None, None] + beta[None, :, None, None]
    y = jnp.maximum(y, 0.0)                                         # (N, Cout, H, W)

    avg_p = jnp.mean(y, axis=(2, 3))                                # (N, Cout)
    max_p = jnp.max(y, axis=(2, 3))                                 # (N, Cout)
    w1 = fc1_w[:, :, 0, 0]
    w2 = fc2_w[:, :, 0, 0]

    def mlp(v):
        return jnp.maximum(v @ w1.T, 0.0) @ w2.T

    ca = jax.nn.sigmoid(mlp(avg_p) + mlp(max_p))                    # (N, Cout)

    c_mean = jnp.mean(ca, axis=1, keepdims=True)                    # (N, 1)
    c_max = jnp.max(ca, axis=1, keepdims=True)                      # (N, 1)
    sa_in = jnp.concatenate([c_mean, c_max], axis=1)[:, :, None, None]   # (N,2,1,1)
    sa = jax.lax.conv_general_dilated(
        sa_in, sa_w, window_strides=(1, 1), padding=((3, 3), (3, 3)),
        dimension_numbers=("NCHW", "OIHW", "NCHW"))                 # (N, 1, 1, 1)
    return jax.nn.sigmoid(sa), ca


if __name__ == "__main__":
    # Small deterministic setup.  out_ch=128 keeps the channel axis lane-dense
    # and satisfies ChannelAttention's ratio=16 (hidden = 128 // 16 = 8).
    N, Cin, Cout, H, W = 2, 4, 128, 16, 16
    Chid = Cout // 16

    key = jax.random.PRNGKey(0)
    ks = jax.random.split(key, 10)

    x = jax.random.normal(ks[0], (N, Cin, H, W), dtype=jnp.float32)

    conv_w = 0.1 * jax.random.normal(ks[1], (Cout, Cin, KH, KW), dtype=jnp.float32)
    conv_b = 0.05 * jax.random.normal(ks[2], (Cout,), dtype=jnp.float32)

    gamma = 1.0 + 0.1 * jax.random.normal(ks[3], (Cout,), dtype=jnp.float32)
    beta = 0.05 * jax.random.normal(ks[4], (Cout,), dtype=jnp.float32)
    run_mean = 0.1 * jax.random.normal(ks[5], (Cout,), dtype=jnp.float32)
    run_var = jax.random.uniform(ks[6], (Cout,), minval=0.5, maxval=1.5,
                                 dtype=jnp.float32)

    fc1_w = 0.1 * jax.random.normal(ks[7], (Chid, Cout, 1, 1), dtype=jnp.float32)
    fc2_w = 0.1 * jax.random.normal(ks[8], (Cout, Chid, 1, 1), dtype=jnp.float32)
    sa_w = 0.1 * jax.random.normal(ks[9], (1, 2, SA_K, SA_K), dtype=jnp.float32)

    out, ca = cbam_forward(x, conv_w, conv_b, gamma, beta, run_mean, run_var,
                           fc1_w, fc2_w, sa_w)
    out = jax.block_until_ready(out)

    ref_out, ref_ca = cbam_reference(x, conv_w, conv_b, gamma, beta, run_mean,
                                     run_var, fc1_w, fc2_w, sa_w)

    assert out.shape == (N, 1, 1, 1), out.shape
    # tolerance accounts for bf16 MXU inputs in the conv (f32 accumulation)
    assert jnp.allclose(ca, ref_ca, atol=2e-2, rtol=2e-2), (
        float(jnp.max(jnp.abs(ca - ref_ca))))
    assert jnp.allclose(out, ref_out, atol=2e-2, rtol=2e-2), (
        float(jnp.max(jnp.abs(out - ref_out))))
    print("KERNEL_OK")
</pallas_src>

<mosaic_0001>
module attributes {stable_mosaic.version = 11 : i64} {
  func.func @cbam_kernel(%arg0: i32, %arg1: memref<1x256x36xbf16, #tpu.memory_space<vmem>>, %arg2: memref<36x128xbf16, #tpu.memory_space<vmem>>, %arg3: memref<1x128xf32, #tpu.memory_space<vmem>>, %arg4: memref<128x8xf32, #tpu.memory_space<vmem>>, %arg5: memref<8x128xf32, #tpu.memory_space<vmem>>, %arg6: memref<1x2xf32, #tpu.memory_space<vmem>>, %arg7: memref<1x1x128xf32, #tpu.memory_space<vmem>>, %arg8: memref<1x1x128xf32, #tpu.memory_space<vmem>>) attributes {dimension_semantics = [#tpu.dimension_semantics<parallel>], iteration_bounds = array<i64: 2>, scalar_prefetch = 0 : i64, scratch_operands = 0 : i64, tpu.core_type = #tpu.core_type<tc>, window_params = [{transform_indices = @transform_0, window_bounds = array<i64: 1, 256, 36>}, {pipeline_mode = #tpu.pipeline_mode<synchronous>, transform_indices = @transform_1, window_bounds = array<i64: 36, 128>}, {pipeline_mode = #tpu.pipeline_mode<synchronous>, transform_indices = @transform_2, window_bounds = array<i64: 1, 128>}, {pipeline_mode = #tpu.pipeline_mode<synchronous>, transform_indices = @transform_3, window_bounds = array<i64: 128, 8>}, {pipeline_mode = #tpu.pipeline_mode<synchronous>, transform_indices = @transform_4, window_bounds = array<i64: 8, 128>}, {pipeline_mode = #tpu.pipeline_mode<synchronous>, transform_indices = @transform_5, window_bounds = array<i64: 1, 2>}, {transform_indices = @transform_6, window_bounds = array<i64: 1, 1, 128>}, {transform_indices = @transform_7, window_bounds = array<i64: 1, 1, 128>}]} {
    %c0 = arith.constant 0 : index
    %c0_0 = arith.constant 0 : index
    %c0_1 = arith.constant 0 : index
    %0 = vector.load %arg1[%c0, %c0_0, %c0_1] : memref<1x256x36xbf16, #tpu.memory_space<vmem>>, vector<1x256x36xbf16>
    %1 = vector.shape_cast %0 : vector<1x256x36xbf16> to vector<256x36xbf16>
    %c0_2 = arith.constant 0 : index
    %c0_3 = arith.constant 0 : index
    %2 = vector.load %arg2[%c0_2, %c0_3] : memref<36x128xbf16, #tpu.memory_space<vmem>>, vector<36x128xbf16>
    %cst = arith.constant dense<0.000000e+00> : vector<256x128xf32>
    %3 = tpu.matmul %1, %2, %cst {dimension_numbers = #tpu.dot_dimension_numbers<[1], [0], [0], [1], [0, 0, 1, 1], [], []>} : vector<256x36xbf16>, vector<36x128xbf16>, vector<256x128xf32> -> vector<256x128xf32>
    %c0_4 = arith.constant 0 : index
    %c0_5 = arith.constant 0 : index
    %4 = vector.load %arg3[%c0_4, %c0_5] : memref<1x128xf32, #tpu.memory_space<vmem>>, vector<1x128xf32>
    %5 = vector.broadcast %4 : vector<1x128xf32> to vector<256x128xf32>
    %6 = arith.addf %3, %5 : vector<256x128xf32>
    %cst_6 = arith.constant 0.000000e+00 : f32
    %7 = vector.broadcast %cst_6 : f32 to vector<256x128xf32>
    %8 = arith.maximumf %6, %7 : vector<256x128xf32>
    %cst_7 = arith.constant dense<0.000000e+00> : vector<128xf32>
    %9 = vector.multi_reduction <add>, %8, %cst_7 [0] : vector<256x128xf32> to vector<128xf32>
    %10 = vector.shape_cast %9 : vector<128xf32> to vector<1x128xf32>
    %cst_8 = arith.constant 2.560000e+02 : f32
    %11 = vector.broadcast %cst_8 : f32 to vector<1x128xf32>
    %12 = arith.divf %10, %11 : vector<1x128xf32>
    %cst_9 = arith.constant dense<0xFF800000> : vector<128xf32>
    %13 = vector.multi_reduction <maximumf>, %8, %cst_9 [0] : vector<256x128xf32> to vector<128xf32>
    %14 = vector.shape_cast %13 : vector<128xf32> to vector<1x128xf32>
    %c0_10 = arith.constant 0 : index
    %c0_11 = arith.constant 0 : index
    %15 = vector.load %arg4[%c0_10, %c0_11] : memref<128x8xf32, #tpu.memory_space<vmem>>, vector<128x8xf32>
    %cst_12 = arith.constant dense<0.000000e+00> : vector<1x8xf32>
    %16 = tpu.matmul %12, %15, %cst_12 {dimension_numbers = #tpu.dot_dimension_numbers<[1], [0], [0], [1], [0, 0, 1, 1], [], []>} : vector<1x128xf32>, vector<128x8xf32>, vector<1x8xf32> -> vector<1x8xf32>
    %cst_13 = arith.constant 0.000000e+00 : f32
    %17 = vector.broadcast %cst_13 : f32 to vector<1x8xf32>
    %18 = arith.maximumf %16, %17 : vector<1x8xf32>
    %c0_14 = arith.constant 0 : index
    %c0_15 = arith.constant 0 : index
    %19 = vector.load %arg5[%c0_14, %c0_15] : memref<8x128xf32, #tpu.memory_space<vmem>>, vector<8x128xf32>
    %cst_16 = arith.constant dense<0.000000e+00> : vector<1x128xf32>
    %20 = tpu.matmul %18, %19, %cst_16 {dimension_numbers = #tpu.dot_dimension_numbers<[1], [0], [0], [1], [0, 0, 1, 1], [], []>} : vector<1x8xf32>, vector<8x128xf32>, vector<1x128xf32> -> vector<1x128xf32>
    %c0_17 = arith.constant 0 : index
    %c0_18 = arith.constant 0 : index
    %21 = vector.load %arg4[%c0_17, %c0_18] : memref<128x8xf32, #tpu.memory_space<vmem>>, vector<128x8xf32>
    %cst_19 = arith.constant dense<0.000000e+00> : vector<1x8xf32>
    %22 = tpu.matmul %14, %21, %cst_19 {dimension_numbers = #tpu.dot_dimension_numbers<[1], [0], [0], [1], [0, 0, 1, 1], [], []>} : vector<1x128xf32>, vector<128x8xf32>, vector<1x8xf32> -> vector<1x8xf32>
    %cst_20 = arith.constant 0.000000e+00 : f32
    %23 = vector.broadcast %cst_20 : f32 to vector<1x8xf32>
    %24 = arith.maximumf %22, %23 : vector<1x8xf32>
    %c0_21 = arith.constant 0 : index
    %c0_22 = arith.constant 0 : index
    %25 = vector.load %arg5[%c0_21, %c0_22] : memref<8x128xf32, #tpu.memory_space<vmem>>, vector<8x128xf32>
    %cst_23 = arith.constant dense<0.000000e+00> : vector<1x128xf32>
    %26 = tpu.matmul %24, %25, %cst_23 {dimension_numbers = #tpu.dot_dimension_numbers<[1], [0], [0], [1], [0, 0, 1, 1], [], []>} : vector<1x8xf32>, vector<8x128xf32>, vector<1x128xf32> -> vector<1x128xf32>
    %27 = arith.addf %20, %26 : vector<1x128xf32>
    %cst_24 = arith.constant 0.000000e+00 : f32
    %28 = vector.broadcast %cst_24 : f32 to vector<1x128xf32>
    %29 = arith.subf %28, %27 : vector<1x128xf32>
    %30 = math.exp %29 : vector<1x128xf32>
    %cst_25 = arith.constant 1.000000e+00 : f32
    %31 = vector.broadcast %cst_25 : f32 to vector<1x128xf32>
    %32 = arith.addf %31, %30 : vector<1x128xf32>
    %cst_26 = arith.constant 1.000000e+00 : f32
    %33 = vector.broadcast %cst_26 : f32 to vector<1x128xf32>
    %34 = arith.divf %33, %32 : vector<1x128xf32>
    %c0_27 = arith.constant 0 : index
    %c0_28 = arith.constant 0 : index
    %c0_29 = arith.constant 0 : index
    %35 = vector.load %arg7[%c0_27, %c0_28, %c0_29] : memref<1x1x128xf32, #tpu.memory_space<vmem>>, vector<1x1x128xf32>
    %36 = vector.shape_cast %35 : vector<1x1x128xf32> to vector<1x128xf32>
    %37 = vector.shape_cast %34 : vector<1x128xf32> to vector<1x1x128xf32>
    tpu.vector_store %arg7[%c0_27, %c0_28, %c0_29], %37 {strides = array<i32>} : memref<1x1x128xf32, #tpu.memory_space<vmem>>, vector<1x1x128xf32>,
    %cst_30 = arith.constant dense<0.000000e+00> : vector<1xf32>
    %38 = vector.multi_reduction <add>, %34, %cst_30 [1] : vector<1x128xf32> to vector<1xf32>
    %39 = vector.shape_cast %38 : vector<1xf32> to vector<1x1xf32>
    %cst_31 = arith.constant 1.280000e+02 : f32
    %40 = vector.broadcast %cst_31 : f32 to vector<1x1xf32>
    %41 = arith.divf %39, %40 : vector<1x1xf32>
    %cst_32 = arith.constant dense<0xFF800000> : vector<1xf32>
    %42 = vector.multi_reduction <maximumf>, %34, %cst_32 [1] : vector<1x128xf32> to vector<1xf32>
    %43 = vector.shape_cast %42 : vector<1xf32> to vector<1x1xf32>
    %c0_33 = arith.constant 0 : index
    %c0_34 = arith.constant 0 : index
    %44 = vector.load %arg6[%c0_33, %c0_34] : memref<1x2xf32, #tpu.memory_space<vmem>>, vector<1x2xf32>
    %45 = vector.extract_strided_slice %44 {offsets = [0, 0], sizes = [1, 1], strides = [1, 1]} : vector<1x2xf32> to vector<1x1xf32>
    %46 = arith.mulf %41, %45 : vector<1x1xf32>
    %47 = vector.extract_strided_slice %44 {offsets = [0, 1], sizes = [1, 1], strides = [1, 1]} : vector<1x2xf32> to vector<1x1xf32>
    %48 = arith.mulf %43, %47 : vector<1x1xf32>
    %49 = arith.addf %46, %48 : vector<1x1xf32>
    %cst_35 = arith.constant 0.000000e+00 : f32
    %50 = vector.broadcast %cst_35 : f32 to vector<1x1xf32>
    %51 = arith.subf %50, %49 : vector<1x1xf32>
    %52 = math.exp %51 : vector<1x1xf32>
    %cst_36 = arith.constant 1.000000e+00 : f32
    %53 = vector.broadcast %cst_36 : f32 to vector<1x1xf32>
    %54 = arith.addf %53, %52 : vector<1x1xf32>
    %cst_37 = arith.constant 1.000000e+00 : f32
    %55 = vector.broadcast %cst_37 : f32 to vector<1x1xf32>
    %56 = arith.divf %55, %54 : vector<1x1xf32>
    %57 = vector.shape_cast %56 : vector<1x1xf32> to vector<1x1xf32>
    %58 = vector.broadcast %57 : vector<1x1xf32> to vector<1x128xf32>
    %c0_38 = arith.constant 0 : index
    %c0_39 = arith.constant 0 : index
    %c0_40 = arith.constant 0 : index
    %59 = vector.load %arg8[%c0_38, %c0_39, %c0_40] : memref<1x1x128xf32, #tpu.memory_space<vmem>>, vector<1x1x128xf32>
    %60 = vector.shape_cast %59 : vector<1x1x128xf32> to vector<1x128xf32>
    %61 = vector.shape_cast %58 : vector<1x128xf32> to vector<1x1x128xf32>
    tpu.vector_store %arg8[%c0_38, %c0_39, %c0_40], %61 {strides = array<i32>} : memref<1x1x128xf32, #tpu.memory_space<vmem>>, vector<1x1x128xf32>,
    return
  }
  func.func @transform_0(%arg0: i32) -> (i32, i32, i32) {
    %c0_i32 = arith.constant 0 : i32
    %c0_i32_0 = arith.constant 0 : i32
    %c0_i32_1 = arith.constant 0 : i32
    return %arg0, %c0_i32, %c0_i32_0 : i32, i32, i32
  }
  func.func @transform_1(%arg0: i32) -> (i32, i32) {
    %c0_i32 = arith.constant 0 : i32
    %c0_i32_0 = arith.constant 0 : i32
    %c0_i32_1 = arith.constant 0 : i32
    return %c0_i32, %c0_i32_0 : i32, i32
  }
  func.func @transform_2(%arg0: i32) -> (i32, i32) {
    %c0_i32 = arith.constant 0 : i32
    %c0_i32_0 = arith.constant 0 : i32
    %c0_i32_1 = arith.constant 0 : i32
    return %c0_i32, %c0_i32_0 : i32, i32
  }
  func.func @transform_3(%arg0: i32) -> (i32, i32) {
    %c0_i32 = arith.constant 0 : i32
    %c0_i32_0 = arith.constant 0 : i32
    %c0_i32_1 = arith.constant 0 : i32
    return %c0_i32, %c0_i32_0 : i32, i32
  }
  func.func @transform_4(%arg0: i32) -> (i32, i32) {
    %c0_i32 = arith.constant 0 : i32
    %c0_i32_0 = arith.constant 0 : i32
    %c0_i32_1 = arith.constant 0 : i32
    return %c0_i32, %c0_i32_0 : i32, i32
  }
  func.func @transform_5(%arg0: i32) -> (i32, i32) {
    %c0_i32 = arith.constant 0 : i32
    %c0_i32_0 = arith.constant 0 : i32
    %c0_i32_1 = arith.constant 0 : i32
    return %c0_i32, %c0_i32_0 : i32, i32
  }
  func.func @transform_6(%arg0: i32) -> (i32, i32, i32) {
    %c0_i32 = arith.constant 0 : i32
    %c0_i32_0 = arith.constant 0 : i32
    %c0_i32_1 = arith.constant 0 : i32
    return %arg0, %c0_i32, %c0_i32_0 : i32, i32, i32
  }
  func.func @transform_7(%arg0: i32) -> (i32, i32, i32) {
    %c0_i32 = arith.constant 0 : i32
    %c0_i32_0 = arith.constant 0 : i32
    %c0_i32_1 = arith.constant 0 : i32
    return %arg0, %c0_i32, %c0_i32_0 : i32, i32, i32
  }
}

</mosaic_0001>

<llo_original>
// kernel: tpu_custom_call.1
$region0: #{tpu_custom_call.1}
  #allocation0 [shape = 'u32[]', space=smem, size = 0x4, offset = 0x4, fixed_abs, tag = 'smem constant byte address 0x4 - core index']
  #allocation1 [shape = 'u32[144,128]{1,0:T(1,128)}', space=vmem, size = 0x12000, scoped, tag = 'internal scratch']
  %s0 = inlined_call_operand.vmem [shape: bf16[2,256,36], index: 0, kind: input, shape index: {}]
  %s1 = inlined_call_operand.vmem [shape: bf16[36,128], index: 1, kind: input, shape index: {}]
  %s2 = inlined_call_operand.vmem [shape: f32[1,128], index: 2, kind: input, shape index: {}]
  %s3 = inlined_call_operand.vmem [shape: f32[128,8], index: 3, kind: input, shape index: {}]
  %s4 = inlined_call_operand.vmem [shape: f32[8,128], index: 4, kind: input, shape index: {}]
  %s5 = inlined_call_operand.vmem [shape: f32[1,2], index: 5, kind: input, shape index: {}]
  %s6 = inlined_call_operand.hbm [shape: f32[2,1,128], index: 6, kind: output, shape index: {0}]
  %s7 = inlined_call_operand.hbm [shape: f32[2,1,128], index: 7, kind: output, shape index: {1}]
  %8 = xla_tuple %s6, %s7
  %s9 = sld [smem:[#allocation0]]
  $region65: #{tpu_custom_call.1} parent=0
    _
  %s11 = ssub.s32 1, %s9
  %s12 = scalar_select 0, %s11, %s9
  $region1: #{tpu_custom_call.1} parent=0
    #allocation2 [shape = 'u8[1024]{0}', space=vmem, size = 0x400, scoped, tag = 'output window, operand 0']
    #allocation3 [shape = 's32[2]{0}', space=sflag, size = 0x8, scoped, tag = 'scoped memory for tpu_custom_call.1']
    #allocation4 [shape = 'u8[1024]{0}', space=vmem, size = 0x400, scoped, tag = 'output window, operand 1']
    #allocation5 [shape = 's32[2]{0}', space=sflag, size = 0x8, scoped, tag = 'scoped memory for tpu_custom_call.1']
    %13 = vsyncpa [#allocation3], 0
    %s14 = scalar_lea.sflag [#allocation3], 1
    %15 = vsyncpa %s14, 0
    %16 = vsyncpa [#allocation5], 0
    %s17 = scalar_lea.sflag [#allocation5], 1
    %18 = vsyncpa %s17, 0
    loop: start=0, step=1, limit=4
    $region2: #{tpu_custom_call.1} parent=1 // loop_pre_header
      _
    $region3: #{tpu_custom_call.1} parent=1 // loop_header
      %s20 = sphi 0, %s24
      %p21 = scmp.ge.s32.totalorder %s20, 4
      %s30 = sphi 0, %s32
      %s33 = sphi 0, %s30
      %s34 = sphi 0, %s33
      %s50 = sphi 0, %s34
      %s54 = sphi 0, %s54
      %s56 = sphi 0, %s54
      %s57 = sphi 0, %s56
      %s71 = sphi 0, %s57
      %s75 = sphi 0, %s75
      %s77 = sphi 0, %s75
      %s78 = sphi 0, %s77
      %s92 = sphi 0, %s78
      %s96 = sphi 0, %s96
      %s98 = sphi 0, %s96
      %s99 = sphi 0, %s98
      %s113 = sphi 0, %s99
      %s117 = sphi 0, %s117
      %s119 = sphi 0, %s117
      %s120 = sphi 0, %s119
      %s134 = sphi 0, %s120
      %s138 = sphi 0, %s138
      %s140 = sphi 0, %s138
      %s141 = sphi 0, %s140
      %s155 = sphi 0, %s141
      %s161 = sphi 0, %s163
      %s164 = sphi 0, %s161
      %s165 = sphi 0, %s164
      %s181 = sphi 0, %s165
      %s187 = sphi 0, %s189
      %s190 = sphi 0, %s187
      %s191 = sphi 0, %s190
      %s207 = sphi 0, %s191
    $region4: #{tpu_custom_call.1} parent=1 // loop_header_branch
      %23 = sbr.rel (%p21) target = $region8
    $region5: #{tpu_custom_call.1} parent=1 // loop_body
      %s25 = ssub.s32 %s20, 1
      %s26 = ssub.s32 %s20, 2
      %s27 = sadd.s32 %s20, 1
      %s28 = ssub.s32 %s20, %s27
      %p29 = scmp.eq.s32.totalorder %s28, 0
      %s31 = sadd.s32 %s30, 1
      %s32 = scalar_select %p29, %s30, %s31
      %p35 = pneg %p29
      %p36 = scmp.eq.s32.totalorder %s20, 1
      %p37 = por %p35, %p36
      %p38 = scmp.ne.s32.totalorder %s30, %s33
      %p39 = scmp.eq.s32.totalorder %s20, 0
      %p40 = por %p38, %p39
      %p41 = scmp.ne.s32.totalorder %s30, %s33
      %p42 = scmp.eq.s32.totalorder %s25, 1
      %p43 = por %p41, %p42
      %p44 = scmp.ne.s32.totalorder %s33, %s34
      %p45 = scmp.eq.s32.totalorder %s25, 0
      %p46 = por %p44, %p45
      %p47 = scmp.ne.s32.totalorder %s33, %s34
      %p48 = scmp.eq.s32.totalorder %s26, 1
      %p49 = por %p47, %p48
      %p51 = scmp.ne.s32.totalorder %s34, %s50
      %p52 = scmp.eq.s32.totalorder %s26, 0
      %p53 = por %p51, %p52
      %s55 = sadd.s32 %s54, 1
      %p58 = scmp.eq.s32.totalorder %s20, 1
      %p59 = scmp.ne.s32.totalorder %s54, %s56
      %p60 = scmp.eq.s32.totalorder %s20, 0
      %p61 = por %p59, %p60
      %p62 = scmp.ne.s32.totalorder %s54, %s56
      %p63 = scmp.eq.s32.totalorder %s25, 1
      %p64 = por %p62, %p63
      %p65 = scmp.ne.s32.totalorder %s56, %s57
      %p66 = scmp.eq.s32.totalorder %s25, 0
      %p67 = por %p65, %p66
      %p68 = scmp.ne.s32.totalorder %s56, %s57
      %p69 = scmp.eq.s32.totalorder %s26, 1
      %p70 = por %p68, %p69
      %p72 = scmp.ne.s32.totalorder %s57, %s71
      %p73 = scmp.eq.s32.totalorder %s26, 0
      %p74 = por %p72, %p73
      %s76 = sadd.s32 %s75, 1
      %p79 = scmp.eq.s32.totalorder %s20, 1
      %p80 = scmp.ne.s32.totalorder %s75, %s77
      %p81 = scmp.eq.s32.totalorder %s20, 0
      %p82 = por %p80, %p81
      %p83 = scmp.ne.s32.totalorder %s75, %s77
      %p84 = scmp.eq.s32.totalorder %s25, 1
      %p85 = por %p83, %p84
      %p86 = scmp.ne.s32.totalorder %s77, %s78
      %p87 = scmp.eq.s32.totalorder %s25, 0
      %p88 = por %p86, %p87
      %p89 = scmp.ne.s32.totalorder %s77, %s78
      %p90 = scmp.eq.s32.totalorder %s26, 1
      %p91 = por %p89, %p90
      %p93 = scmp.ne.s32.totalorder %s78, %s92
      %p94 = scmp.eq.s32.totalorder %s26, 0
      %p95 = por %p93, %p94
      %s97 = sadd.s32 %s96, 1
      %p100 = scmp.eq.s32.totalorder %s20, 1
      %p101 = scmp.ne.s32.totalorder %s96, %s98
      %p102 = scmp.eq.s32.totalorder %s20, 0
      %p103 = por %p101, %p102
      %p104 = scmp.ne.s32.totalorder %s96, %s98
      %p105 = scmp.eq.s32.totalorder %s25, 1
      %p106 = por %p104, %p105
      %p107 = scmp.ne.s32.totalorder %s98, %s99
      %p108 = scmp.eq.s32.totalorder %s25, 0
      %p109 = por %p107, %p108
      %p110 = scmp.ne.s32.totalorder %s98, %s99
      %p111 = scmp.eq.s32.totalorder %s26, 1
      %p112 = por %p110, %p111
      %p114 = scmp.ne.s32.totalorder %s99, %s113
      %p115 = scmp.eq.s32.totalorder %s26, 0
      %p116 = por %p114, %p115
      %s118 = sadd.s32 %s117, 1
      %p121 = scmp.eq.s32.totalorder %s20, 1
      %p122 = scmp.ne.s32.totalorder %s117, %s119
      %p123 = scmp.eq.s32.totalorder %s20, 0
      %p124 = por %p122, %p123
      %p125 = scmp.ne.s32.totalorder %s117, %s119
      %p126 = scmp.eq.s32.totalorder %s25, 1
      %p127 = por %p125, %p126
      %p128 = scmp.ne.s32.totalorder %s119, %s120
      %p129 = scmp.eq.s32.totalorder %s25, 0
      %p130 = por %p128, %p129
      %p131 = scmp.ne.s32.totalorder %s119, %s120
      %p132 = scmp.eq.s32.totalorder %s26, 1
      %p133 = por %p131, %p132
      %p135 = scmp.ne.s32.totalorder %s120, %s134
      %p136 = scmp.eq.s32.totalorder %s26, 0
      %p137 = por %p135, %p136
      %s139 = sadd.s32 %s138, 1
      %p142 = scmp.eq.s32.totalorder %s20, 1
      %p143 = scmp.ne.s32.totalorder %s138, %s140
      %p144 = scmp.eq.s32.totalorder %s20, 0
      %p145 = por %p143, %p144
      %p146 = scmp.ne.s32.totalorder %s138, %s140
      %p147 = scmp.eq.s32.totalorder %s25, 1
      %p148 = por %p146, %p147
      %p149 = scmp.ne.s32.totalorder %s140, %s141
      %p150 = scmp.eq.s32.totalorder %s25, 0
      %p151 = por %p149, %p150
      %p152 = scmp.ne.s32.totalorder %s140, %s141
      %p153 = scmp.eq.s32.totalorder %s26, 1
      %p154 = por %p152, %p153
      %p156 = scmp.ne.s32.totalorder %s141, %s155
      %p157 = scmp.eq.s32.totalorder %s26, 0
      %p158 = por %p156, %p157
      %s159 = ssub.s32 %s20, %s27
      %p160 = scmp.eq.s32.totalorder %s159, 0
      %s162 = sadd.s32 %s161, 1
      %s163 = scalar_select %p160, %s161, %s162
      %p166 = pneg %p160
      %p167 = scmp.eq.s32.totalorder %s20, 1
      %p168 = por %p166, %p167
      %p169 = scmp.ne.s32.totalorder %s161, %s164
      %p170 = scmp.eq.s32.totalorder %s20, 0
      %p171 = por %p169, %p170
      %p172 = scmp.ne.s32.totalorder %s161, %s164
      %p173 = scmp.eq.s32.totalorder %s25, 1
      %p174 = por %p172, %p173
      %p175 = scmp.ne.s32.totalorder %s164, %s165
      %p176 = scmp.eq.s32.totalorder %s25, 0
      %p177 = por %p175, %p176
      %p178 = scmp.ne.s32.totalorder %s164, %s165
      %p179 = scmp.eq.s32.totalorder %s26, 1
      %p180 = por %p178, %p179
      %p182 = scmp.ne.s32.totalorder %s165, %s181
      %p183 = scmp.eq.s32.totalorder %s26, 0
      %p184 = por %p182, %p183
      %s185 = ssub.s32 %s20, %s27
      %p186 = scmp.eq.s32.totalorder %s185, 0
      %s188 = sadd.s32 %s187, 1
      %s189 = scalar_select %p186, %s187, %s188
      %p192 = pneg %p186
      %p193 = scmp.eq.s32.totalorder %s20, 1
      %p194 = por %p192, %p193
      %p195 = scmp.ne.s32.totalorder %s187, %s190
      %p196 = scmp.eq.s32.totalorder %s20, 0
      %p197 = por %p195, %p196
      %p198 = scmp.ne.s32.totalorder %s187, %s190
      %p199 = scmp.eq.s32.totalorder %s25, 1
      %p200 = por %p198, %p199
      %p201 = scmp.ne.s32.totalorder %s190, %s191
      %p202 = scmp.eq.s32.totalorder %s25, 0
      %p203 = por %p201, %p202
      %p204 = scmp.ne.s32.totalorder %s190, %s191
      %p205 = scmp.eq.s32.totalorder %s26, 1
      %p206 = por %p204, %p205
      %p208 = scmp.ne.s32.totalorder %s191, %s207
      %p209 = scmp.eq.s32.totalorder %s26, 0
      %p210 = por %p208, %p209
      %p211 = scmp.le.s32.totalorder 1, %s20
      %p212 = scmp.lt.s32.totalorder %s20, 3
      %p213 = pnand %p211, %p212
      %p214 = pneg %p213
      // Predicated region
      $region9: #{tpu_custom_call.1} parent=5 // pred_check
        _
      $region10: #{tpu_custom_call.1} parent=5 // pred_check_branch
        %216 = sbr.rel (%p213) target = $region12
      $region11: #{tpu_custom_call.1} parent=5 // pred_region
        %s217 = ssub.s32 %s20, 1
        // Predicated region
        $region13: #{tpu_custom_call.1} parent=11 // pred_check
          %p218 = pneg %p67
        $region14: #{tpu_custom_call.1} parent=11 // pred_check_branch
          %220 = sbr.rel (%p218) target = $region16
        $region15: #{tpu_custom_call.1} parent=11 // pred_region
          _
        $region16: #{tpu_custom_call.1} parent=11 // pred_fallthru
          _
        // Predicated region
        $region17: #{tpu_custom_call.1} parent=11 // pred_check
          %p221 = pneg %p88
        $region18: #{tpu_custom_call.1} parent=11 // pred_check_branch
          %223 = sbr.rel (%p221) target = $region20
        $region19: #{tpu_custom_call.1} parent=11 // pred_region
          _
        $region20: #{tpu_custom_call.1} parent=11 // pred_fallthru
          _
        // Predicated region
        $region21: #{tpu_custom_call.1} parent=11 // pred_check
          %p224 = pneg %p109
        $region22: #{tpu_custom_call.1} parent=11 // pred_check_branch
          %226 = sbr.rel (%p224) target = $region24
        $region23: #{tpu_custom_call.1} parent=11 // pred_region
          _
        $region24: #{tpu_custom_call.1} parent=11 // pred_fallthru
          _
        // Predicated region
        $region25: #{tpu_custom_call.1} parent=11 // pred_check
          %p227 = pneg %p130
        $region26: #{tpu_custom_call.1} parent=11 // pred_check_branch
          %229 = sbr.rel (%p227) target = $region28
        $region27: #{tpu_custom_call.1} parent=11 // pred_region
          _
        $region28: #{tpu_custom_call.1} parent=11 // pred_fallthru
          _
        // Predicated region
        $region29: #{tpu_custom_call.1} parent=11 // pred_check
          %p230 = pneg %p151
        $region30: #{tpu_custom_call.1} parent=11 // pred_check_branch
          %232 = sbr.rel (%p230) target = $region32
        $region31: #{tpu_custom_call.1} parent=11 // pred_region
          _
        $region32: #{tpu_custom_call.1} parent=11 // pred_fallthru
          _
      $region12: #{tpu_custom_call.1} parent=5 // pred_fallthru
        _
      %p233 = scmp.lt.s32.totalorder %s20, 2
      // Predicated region
      $region33: #{tpu_custom_call.1} parent=5 // pred_check
        %p234 = pneg %p233
      $region34: #{tpu_custom_call.1} parent=5 // pred_check_branch
        %236 = sbr.rel (%p234) target = $region36
      $region35: #{tpu_custom_call.1} parent=5 // pred_region
        // Predicated region
        $region37: #{tpu_custom_call.1} parent=35 // pred_check
          %p237 = pneg %p40
        $region38: #{tpu_custom_call.1} parent=35 // pred_check_branch
          %239 = sbr.rel (%p237) target = $region40
        $region39: #{tpu_custom_call.1} parent=35 // pred_region
          %p240 = scmp.lt.s32.totalorder %s20, 1
          %s241 = scalar_select %p240, %s20, 1
          %s242 = smul.addr %s241, 32
          %s243 = smul.addr %s242, 4
          %s244 = scalar_lea.vmem %s0, %s243
        $region40: #{tpu_custom_call.1} parent=35 // pred_fallthru
          _
      $region36: #{tpu_custom_call.1} parent=5 // pred_fallthru
        _
      %p245 = scmp.le.s32.totalorder 1, %s20
      %p246 = scmp.lt.s32.totalorder %s20, 3
      %p247 = pnand %p245, %p246
      %p248 = pneg %p247
      // Predicated region
      $region41: #{tpu_custom_call.1} parent=5 // pred_check
        _
      $region42: #{tpu_custom_call.1} parent=5 // pred_check_branch
        %250 = sbr.rel (%p247) target = $region44
      $region43: #{tpu_custom_call.1} parent=5 // pred_region
        %s251 = ssub.s32 %s20, 1
        %p252 = scmp.lt.s32.totalorder %s25, 1
        %s253 = scalar_select %p252, %s25, 1
        %s254 = smul.addr %s253, 32
        %s255 = smul.addr %s254, 4
        %s256 = scalar_lea.vmem %s0, %s255
        %p257 = pneg %p46
        %p258 = pneg %p43
        %p259 = pneg %p67
        %p260 = pneg %p64
        %p261 = pneg %p88
        %p262 = pneg %p85
        %p263 = pneg %p109
        %p264 = pneg %p106
        %p265 = pneg %p130
        %p266 = pneg %p127
        %p267 = pneg %p151
        %p268 = pneg %p148
        %p269 = pneg %p177
        %p270 = pneg %p174
        %s271 = sand.u32 %s164, 1
        %s272 = scalar_lea.sflag [#allocation3], %s271
        %s273 = sand.u32 %s164, 1
        %s274 = scalar_lea.vmem [#allocation2], %s273
        %p275 = pneg %p203
        %p276 = pneg %p200
        %s277 = sand.u32 %s190, 1
        %s278 = scalar_lea.sflag [#allocation5], %s277
        %s279 = sand.u32 %s190, 1
        %s280 = scalar_lea.vmem [#allocation4], %s279
        %p281 = scmp.lt.s32.totalorder %s25, 1
        %s282 = scalar_select %p281, %s25, 1
        %s283 = smul.addr %s282, 32
        %s284 = smul.addr %s283, 4
        %s285 = scalar_lea.vmem %s0, %s284
        %v287 = vld [vmem:[%s285] sm:$0xf]
        %v288 = vld [vmem:[%s285 + $0x4] sm:$0xf]
        %v289 = vld [vmem:[%s285 + $0x8] sm:$0xf]
        %v290 = vld [vmem:[%s285 + $0xc] sm:$0xf]
        %v291 = vld [vmem:[%s285 + $0x10] sm:$0xf]
        %v292 = vld [vmem:[%s285 + $0x14] sm:$0xf]
        %v293 = vld [vmem:[%s285 + $0x18] sm:$0xf]
        %v294 = vld [vmem:[%s285 + $0x1c] sm:$0xf]
        %v295 = vld [vmem:[%s285 + $0x20] sm:$0xf]
        %v296 = vld [vmem:[%s285 + $0x24] sm:$0xf]
        %v297 = vld [vmem:[%s285 + $0x28] sm:$0xf]
        %v298 = vld [vmem:[%s285 + $0x2c] sm:$0xf]
        %v299 = vld [vmem:[%s285 + $0x30] sm:$0xf]
        %v300 = vld [vmem:[%s285 + $0x34] sm:$0xf]
        %v301 = vld [vmem:[%s285 + $0x38] sm:$0xf]
        %v302 = vld [vmem:[%s285 + $0x3c] sm:$0xf]
        %v303 = vld [vmem:[%s285 + $0x40] sm:$0xf]
        %v304 = vld [vmem:[%s285 + $0x44] sm:$0xf]
        %v305 = vld [vmem:[%s285 + $0x48] sm:$0xf]
        %v306 = vld [vmem:[%s285 + $0x4c] sm:$0xf]
        %v307 = vld [vmem:[%s285 + $0x50] sm:$0xf]
        %v308 = vld [vmem:[%s285 + $0x54] sm:$0xf]
        %v309 = vld [vmem:[%s285 + $0x58] sm:$0xf]
        %v310 = vld [vmem:[%s285 + $0x5c] sm:$0xf]
        %v311 = vld [vmem:[%s285 + $0x60] sm:$0xf]
        %v312 = vld [vmem:[%s285 + $0x64] sm:$0xf]
        %v313 = vld [vmem:[%s285 + $0x68] sm:$0xf]
        %v314 = vld [vmem:[%s285 + $0x6c] sm:$0xf]
        %v315 = vld [vmem:[%s285 + $0x70] sm:$0xf]
        %v316 = vld [vmem:[%s285 + $0x74] sm:$0xf]
        %v317 = vld [vmem:[%s285 + $0x78] sm:$0xf]
        %v318 = vld [vmem:[%s285 + $0x7c] sm:$0xf]
        %v319 = vld [vmem:[%s1] sm:$0xf]
        %v320 = vld [vmem:[%s1 + $0x4] sm:$0xf]
        %v321 = vld [vmem:[%s1 + $0x8] sm:$0xf]
        %v322 = vld [vmem:[%s1 + $0xc] sm:$0xf]
        %v323 = vld [vmem:[%s1 + $0x10] sm:$0x3]
        %v324 = vld [vmem:[%s2] sm:$0x1]
        %v326 = vlaneseq
        %v327 = vshrl.u32 %v326, 7
        %v328 = vsub.s32 0, %v327
        %v329 = vrot.slane %v324, %v328
        %v363 = vunpack.c.l.b16 %v287
        %v364 = vunpack.c.l.b16 %v288
        %v365 = vunpack.c.l.b16 %v289
        %v366 = vunpack.c.l.b16 %v290
        %v367 = vunpack.c.l.b16 %v291
        %v368 = vunpack.c.l.b16 %v292
        %v369 = vunpack.c.l.b16 %v293
        %v370 = vunpack.c.l.b16 %v294
        %v371 = vunpack.c.l.b16 %v295
        %v372 = vunpack.c.l.b16 %v296
        %v373 = vunpack.c.l.b16 %v297
        %v374 = vunpack.c.l.b16 %v298
        %v375 = vunpack.c.l.b16 %v299
        %v376 = vunpack.c.l.b16 %v300
        %v377 = vunpack.c.l.b16 %v301
        %v378 = vunpack.c.l.b16 %v302
        %v379 = vunpack.c.l.b16 %v303
        %v380 = vunpack.c.l.b16 %v304
        %v381 = vunpack.c.l.b16 %v305
        %v382 = vunpack.c.l.b16 %v306
        %v383 = vunpack.c.l.b16 %v307
        %v384 = vunpack.c.l.b16 %v308
        %v385 = vunpack.c.l.b16 %v309
        %v386 = vunpack.c.l.b16 %v310
        %v387 = vunpack.c.l.b16 %v311
        %v388 = vunpack.c.l.b16 %v312
        %v389 = vunpack.c.l.b16 %v313
        %v390 = vunpack.c.l.b16 %v314
        %v391 = vunpack.c.l.b16 %v315
        %v392 = vunpack.c.l.b16 %v316
        %v393 = vunpack.c.l.b16 %v317
        %v394 = vunpack.c.l.b16 %v318
        %v395 = vpack.c.b16 %v364, %v363
        %v396 = vpack.c.b16 %v366, %v365
        %v397 = vpack.c.b16 %v368, %v367
        %v398 = vpack.c.b16 %v370, %v369
        %v399 = vpack.c.b16 %v372, %v371
        %v400 = vpack.c.b16 %v374, %v373
        %v401 = vpack.c.b16 %v376, %v375
        %v402 = vpack.c.b16 %v378, %v377
        %v403 = vpack.c.b16 %v380, %v379
        %v404 = vpack.c.b16 %v382, %v381
        %v405 = vpack.c.b16 %v384, %v383
        %v406 = vpack.c.b16 %v386, %v385
        %v407 = vpack.c.b16 %v388, %v387
        %v408 = vpack.c.b16 %v390, %v389
        %v409 = vpack.c.b16 %v392, %v391
        %v410 = vpack.c.b16 %v394, %v393
        %v416 = vunpack.c.l.b16 %v319
        %v417 = vunpack.c.l.b16 %v320
        %v418 = vunpack.c.l.b16 %v321
        %v419 = vunpack.c.l.b16 %v322
        %v420 = vunpack.c.l.b16 %v323
        %v421 = vpack.c.b16 %v417, %v416
        %v422 = vpack.c.b16 %v419, %v418
        %v423 = vpack.c.b16 %v420, %v420
        %vm426 = vcmask 293888
        %v428 = vsel %vm426, %v395, 0
        %v431 = vsel %vm426, %v396, 0
        %v434 = vsel %vm426, %v397, 0
        %v437 = vsel %vm426, %v398, 0
        %v440 = vsel %vm426, %v399, 0
        %v443 = vsel %vm426, %v400, 0
        %v446 = vsel %vm426, %v401, 0
        %v449 = vsel %vm426, %v402, 0
        %v452 = vsel %vm426, %v403, 0
        %v455 = vsel %vm426, %v404, 0
        %v458 = vsel %vm426, %v405, 0
        %v461 = vsel %vm426, %v406, 0
        %v464 = vsel %vm426, %v407, 0
        %v467 = vsel %vm426, %v408, 0
        %v470 = vsel %vm426, %v409, 0
        %v473 = vsel %vm426, %v410, 0
        %vm475 = vcmask 1041408
        %v477 = vsel %vm475, %v423, 0
        %479 = vmatprep.subr.bf16.mxu0 0
        %480 = vmatpush1.bf16.msra.mxu0 %v421
        %481 = vmatprep.subr.bf16.mxu0 0
        %482 = vmatpush1.bf16.msra.mxu0 %v422
        %483 = vmatprep.subr.bf16.mxu0 0
        %484 = vmatpush1.bf16.msra.mxu0 %v477
        %485 = vmatprep.subr.bf16.mxu0 0
        %486 = vmatpush1.bf16.msra.mxu0 0
        %487 = vmatprep.subr.bf16.mxu0 0
        %488 = vmatpush1.bf16.msra.mxu0 0
        %489 = vmatprep.subr.bf16.mxu0 0
        %490 = vmatpush1.bf16.msra.mxu0 0
        %491 = vmatprep.subr.bf16.mxu0 0
        %492 = vmatpush1.bf16.msra.mxu0 0
        %493 = vmatprep.subr.bf16.mxu0 0
        %494 = vmatpush1.bf16.msra.mxu0 0
        %495 = vmatprep.subr.bf16.mxu0 0
        %496 = vmatpush1.bf16.msra.mxu0 0
        %497 = vmatprep.subr.bf16.mxu0 0
        %498 = vmatpush1.bf16.msra.mxu0 0
        %499 = vmatprep.subr.bf16.mxu0 0
        %500 = vmatpush1.bf16.msra.mxu0 0
        %501 = vmatprep.subr.bf16.mxu0 0
        %502 = vmatpush1.bf16.msra.mxu0 0
        %503 = vmatprep.subr.bf16.mxu0 0
        %504 = vmatpush1.bf16.msra.mxu0 0
        %505 = vmatprep.subr.bf16.mxu0 0
        %506 = vmatpush1.bf16.msra.mxu0 0
        %507 = vmatprep.subr.bf16.mxu0 0
        %508 = vmatpush1.bf16.msra.mxu0 0
        %509 = vmatprep.subr.bf16.mxu0 0
        %510 = vmatpush1.bf16.msra.mxu0 0
        %511 = vmatprep.mubr.bf16.mxu0 0
        %512 = vmatmul.mubr.bf16.gmra.mrb[0].mxu0 %v428
        %v513 = vpop.f32.mrb[0].mxu0
        %v514 = vadd.f32 %v329, %v513
        %v515 = vpop.f32.mrb[0].mxu0
        %v516 = vpop.f32.mrb[0].mxu0
        %v517 = vadd.f32 %v329, %v516
        %v518 = vpop.f32.mrb[0].mxu0
        %519 = vmatprep.mubr.bf16.mxu0 0
        %520 = vmatmul.mubr.bf16.gmra.mrb[0].mxu0 %v431
        %v521 = vpop.f32.mrb[0].mxu0
        %v522 = vadd.f32 %v329, %v521
        %v523 = vpop.f32.mrb[0].mxu0
        %v524 = vpop.f32.mrb[0].mxu0
        %v525 = vadd.f32 %v329, %v524
        %v526 = vpop.f32.mrb[0].mxu0
        %527 = vmatprep.mubr.bf16.mxu0 0
        %528 = vmatmul.mubr.bf16.gmra.mrb[0].mxu0 %v434
        %v529 = vpop.f32.mrb[0].mxu0
        %v530 = vadd.f32 %v329, %v529
        %v531 = vpop.f32.mrb[0].mxu0
        %v532 = vpop.f32.mrb[0].mxu0
        %v533 = vadd.f32 %v329, %v532
        %v534 = vpop.f32.mrb[0].mxu0
        %535 = vmatprep.mubr.bf16.mxu0 0
        %536 = vmatmul.mubr.bf16.gmra.mrb[0].mxu0 %v437
        %v537 = vpop.f32.mrb[0].mxu0
        %v538 = vadd.f32 %v329, %v537
        %v539 = vpop.f32.mrb[0].mxu0
        %v540 = vpop.f32.mrb[0].mxu0
        %v541 = vadd.f32 %v329, %v540
        %v542 = vpop.f32.mrb[0].mxu0
        %543 = vmatprep.mubr.bf16.mxu0 0
        %544 = vmatmul.mubr.bf16.gmra.mrb[0].mxu0 %v440
        %v545 = vpop.f32.mrb[0].mxu0
        %v546 = vadd.f32 %v329, %v545
        %v547 = vpop.f32.mrb[0].mxu0
        %v548 = vpop.f32.mrb[0].mxu0
        %v549 = vadd.f32 %v329, %v548
        %v550 = vpop.f32.mrb[0].mxu0
        %551 = vmatprep.mubr.bf16.mxu0 0
        %552 = vmatmul.mubr.bf16.gmra.mrb[0].mxu0 %v443
        %v553 = vpop.f32.mrb[0].mxu0
        %v554 = vadd.f32 %v329, %v553
        %v555 = vpop.f32.mrb[0].mxu0
        %v556 = vpop.f32.mrb[0].mxu0
        %v557 = vadd.f32 %v329, %v556
        %v558 = vpop.f32.mrb[0].mxu0
        %559 = vmatprep.mubr.bf16.mxu0 0
        %560 = vmatmul.mubr.bf16.gmra.mrb[0].mxu0 %v446
        %v561 = vpop.f32.mrb[0].mxu0
        %v562 = vadd.f32 %v329, %v561
        %v563 = vpop.f32.mrb[0].mxu0
        %v564 = vpop.f32.mrb[0].mxu0
        %v565 = vadd.f32 %v329, %v564
        %v566 = vpop.f32.mrb[0].mxu0
        %567 = vmatprep.mubr.bf16.mxu0 0
        %568 = vmatmul.mubr.bf16.gmra.mrb[0].mxu0 %v449
        %v569 = vpop.f32.mrb[0].mxu0
        %v570 = vadd.f32 %v329, %v569
        %v571 = vpop.f32.mrb[0].mxu0
        %v572 = vpop.f32.mrb[0].mxu0
        %v573 = vadd.f32 %v329, %v572
        %v574 = vpop.f32.mrb[0].mxu0
        %575 = vmatprep.mubr.bf16.mxu0 0
        %576 = vmatmul.mubr.bf16.gmra.mrb[0].mxu0 %v452
        %v577 = vpop.f32.mrb[0].mxu0
        %v578 = vadd.f32 %v329, %v577
        %v579 = vpop.f32.mrb[0].mxu0
        %v580 = vpop.f32.mrb[0].mxu0
        %v581 = vadd.f32 %v329, %v580
        %v582 = vpop.f32.mrb[0].mxu0
        %583 = vmatprep.mubr.bf16.mxu0 0
        %584 = vmatmul.mubr.bf16.gmra.mrb[0].mxu0 %v455
        %v585 = vpop.f32.mrb[0].mxu0
        %v586 = vadd.f32 %v329, %v585
        %v587 = vpop.f32.mrb[0].mxu0
        %v588 = vpop.f32.mrb[0].mxu0
        %v589 = vadd.f32 %v329, %v588
        %v590 = vpop.f32.mrb[0].mxu0
        %591 = vmatprep.mubr.bf16.mxu0 0
        %592 = vmatmul.mubr.bf16.gmra.mrb[0].mxu0 %v458
        %v593 = vpop.f32.mrb[0].mxu0
        %v594 = vadd.f32 %v329, %v593
        %v595 = vpop.f32.mrb[0].mxu0
        %v596 = vpop.f32.mrb[0].mxu0
        %v597 = vadd.f32 %v329, %v596
        %v598 = vpop.f32.mrb[0].mxu0
        %599 = vmatprep.mubr.bf16.mxu0 0
        %600 = vmatmul.mubr.bf16.gmra.mrb[0].mxu0 %v461
        %v601 = vpop.f32.mrb[0].mxu0
        %v602 = vadd.f32 %v329, %v601
        %v603 = vpop.f32.mrb[0].mxu0
        %v604 = vpop.f32.mrb[0].mxu0
        %v605 = vadd.f32 %v329, %v604
        %v606 = vpop.f32.mrb[0].mxu0
        %607 = vmatprep.mubr.bf16.mxu0 0
        %608 = vmatmul.mubr.bf16.gmra.mrb[0].mxu0 %v464
        %v609 = vpop.f32.mrb[0].mxu0
        %v610 = vadd.f32 %v329, %v609
        %v611 = vpop.f32.mrb[0].mxu0
        %v612 = vpop.f32.mrb[0].mxu0
        %v613 = vadd.f32 %v329, %v612
        %v614 = vpop.f32.mrb[0].mxu0
        %615 = vmatprep.mubr.bf16.mxu0 0
        %616 = vmatmul.mubr.bf16.gmra.mrb[0].mxu0 %v467
        %v617 = vpop.f32.mrb[0].mxu0
        %v618 = vadd.f32 %v329, %v617
        %v619 = vpop.f32.mrb[0].mxu0
        %v620 = vpop.f32.mrb[0].mxu0
        %v621 = vadd.f32 %v329, %v620
        %v622 = vpop.f32.mrb[0].mxu0
        %623 = vmatprep.mubr.bf16.mxu0 0
        %624 = vmatmul.mubr.bf16.gmra.mrb[0].mxu0 %v470
        %v625 = vpop.f32.mrb[0].mxu0
        %v626 = vadd.f32 %v329, %v625
        %v627 = vpop.f32.mrb[0].mxu0
        %v628 = vpop.f32.mrb[0].mxu0
        %v629 = vadd.f32 %v329, %v628
        %v630 = vpop.f32.mrb[0].mxu0
        %631 = vmatprep.mubr.bf16.mxu0 0
        %632 = vmatmul.mubr.bf16.gmra.mrb[0].mxu0 %v473
        %v633 = vpop.f32.mrb[0].mxu0
        %v634 = vadd.f32 %v329, %v633
        %v635 = vpop.f32.mrb[0].mxu0
        %v636 = vpop.f32.mrb[0].mxu0
        %v637 = vadd.f32 %v329, %v636
        %v638 = vpop.f32.mrb[0].mxu0
        %639 = vdwg.mxu0
        %v640 = vmax.f32 %v514, 0.0
        %v641 = vmax.f32 %v517, 0.0
        %v642 = vmax.f32 %v522, 0.0
        %v643 = vmax.f32 %v525, 0.0
        %v644 = vmax.f32 %v530, 0.0
        %v645 = vmax.f32 %v533, 0.0
        %v646 = vmax.f32 %v538, 0.0
        %v647 = vmax.f32 %v541, 0.0
        %v648 = vmax.f32 %v546, 0.0
        %v649 = vmax.f32 %v549, 0.0
        %v650 = vmax.f32 %v554, 0.0
        %v651 = vmax.f32 %v557, 0.0
        %v652 = vmax.f32 %v562, 0.0
        %v653 = vmax.f32 %v565, 0.0
        %v654 = vmax.f32 %v570, 0.0
        %v655 = vmax.f32 %v573, 0.0
        %v656 = vmax.f32 %v578, 0.0
        %v657 = vmax.f32 %v581, 0.0
        %v658 = vmax.f32 %v586, 0.0
        %v659 = vmax.f32 %v589, 0.0
        %v660 = vmax.f32 %v594, 0.0
        %v661 = vmax.f32 %v597, 0.0
        %v662 = vmax.f32 %v602, 0.0
        %v663 = vmax.f32 %v605, 0.0
        %v664 = vmax.f32 %v610, 0.0
        %v665 = vmax.f32 %v613, 0.0
        %v666 = vmax.f32 %v618, 0.0
        %v667 = vmax.f32 %v621, 0.0
        %v668 = vmax.f32 %v626, 0.0
        %v669 = vmax.f32 %v629, 0.0
        %v670 = vmax.f32 %v634, 0.0
        %v671 = vmax.f32 %v637, 0.0
        %v672 = vadd.f32 %v640, %v641
        %v673 = vadd.f32 %v672, %v642
        %v674 = vadd.f32 %v673, %v643
        %v675 = vadd.f32 %v674, %v644
        %v676 = vadd.f32 %v675, %v645
        %v677 = vadd.f32 %v676, %v646
        %v678 = vadd.f32 %v677, %v647
        %v679 = vadd.f32 %v678, %v648
        %v680 = vadd.f32 %v679, %v649
        %v681 = vadd.f32 %v680, %v650
        %v682 = vadd.f32 %v681, %v651
        %v683 = vadd.f32 %v682, %v652
        %v684 = vadd.f32 %v683, %v653
        %v685 = vadd.f32 %v684, %v654
        %v686 = vadd.f32 %v685, %v655
        %v687 = vadd.f32 %v686, %v656
        %v688 = vadd.f32 %v687, %v657
        %v689 = vadd.f32 %v688, %v658
        %v690 = vadd.f32 %v689, %v659
        %v691 = vadd.f32 %v690, %v660
        %v692 = vadd.f32 %v691, %v661
        %v693 = vadd.f32 %v692, %v662
        %v694 = vadd.f32 %v693, %v663
        %v695 = vadd.f32 %v694, %v664
        %v696 = vadd.f32 %v695, %v665
        %v697 = vadd.f32 %v696, %v666
        %v698 = vadd.f32 %v697, %v667
        %v699 = vadd.f32 %v698, %v668
        %v700 = vadd.f32 %v699, %v669
        %v701 = vadd.f32 %v700, %v670
        %v702 = vadd.f32 %v701, %v671
        %v703 = vrot.slane %v702, 4
        %v704 = vadd.f32 %v702, %v703
        %v705 = vrot.slane %v704, 2
        %v706 = vadd.f32 %v704, %v705
        %v707 = vrot.slane %v706, 1
        %v708 = vadd.f32 %v706, %v707
        %v709 = vrcp.pop 256.0
        %v710 = vmul.f32 %v708, %v709
        %v711 = vmax.f32 %v640, %v644
        %v712 = vmax.f32 %v641, %v645
        %v713 = vmax.f32 %v642, %v646
        %v714 = vmax.f32 %v643, %v647
        %v715 = vmax.f32 %v711, %v648
        %v716 = vmax.f32 %v712, %v649
        %v717 = vmax.f32 %v713, %v650
        %v718 = vmax.f32 %v714, %v651
        %v719 = vmax.f32 %v715, %v652
        %v720 = vmax.f32 %v716, %v653
        %v721 = vmax.f32 %v717, %v654
        %v722 = vmax.f32 %v718, %v655
        %v723 = vmax.f32 %v719, %v656
        %v724 = vmax.f32 %v720, %v657
        %v725 = vmax.f32 %v721, %v658
        %v726 = vmax.f32 %v722, %v659
        %v727 = vmax.f32 %v723, %v660
        %v728 = vmax.f32 %v724, %v661
        %v729 = vmax.f32 %v725, %v662
        %v730 = vmax.f32 %v726, %v663
        %v731 = vmax.f32 %v727, %v664
        %v732 = vmax.f32 %v728, %v665
        %v733 = vmax.f32 %v729, %v666
        %v734 = vmax.f32 %v730, %v667
        %v735 = vmax.f32 %v731, %v668
        %v736 = vmax.f32 %v732, %v669
        %v737 = vmax.f32 %v733, %v670
        %v738 = vmax.f32 %v734, %v671
        %v739 = vmax.f32 %v735, %v736
        %v740 = vmax.f32 %v737, %v738
        %v741 = vmax.f32 %v739, %v740
        %v742 = vrot.slane %v741, 4
        %v743 = vmax.f32 %v741, %v742
        %v744 = vrot.slane %v743, 2
        %v745 = vmax.f32 %v743, %v744
        %v746 = vrot.slane %v745, 1
        %v747 = vmax.f32 %v745, %v746
        %v748 = vld [vmem:[%s3] sm:$0xff]
        %v749 = vld [vmem:[%s3 + $0x8] sm:$0xff]
        %v750 = vld [vmem:[%s3 + $0x10] sm:$0xff]
        %v751 = vld [vmem:[%s3 + $0x18] sm:$0xff]
        %v752 = vld [vmem:[%s3 + $0x20] sm:$0xff]
        %v753 = vld [vmem:[%s3 + $0x28] sm:$0xff]
        %v754 = vld [vmem:[%s3 + $0x30] sm:$0xff]
        %v755 = vld [vmem:[%s3 + $0x38] sm:$0xff]
        %v756 = vld [vmem:[%s3 + $0x40] sm:$0xff]
        %v757 = vld [vmem:[%s3 + $0x48] sm:$0xff]
        %v758 = vld [vmem:[%s3 + $0x50] sm:$0xff]
        %v759 = vld [vmem:[%s3 + $0x58] sm:$0xff]
        %v760 = vld [vmem:[%s3 + $0x60] sm:$0xff]
        %v761 = vld [vmem:[%s3 + $0x68] sm:$0xff]
        %v762 = vld [vmem:[%s3 + $0x70] sm:$0xff]
        %v763 = vld [vmem:[%s3 + $0x78] sm:$0xff]
        %764 = vmatprep.subr.mxu0 0.0
        %765 = vmatpush1.msra.mxu0 %v748
        %766 = vmatprep.subr.mxu0 0.0
        %767 = vmatpush1.msra.mxu0 %v749
        %768 = vmatprep.subr.mxu0 0.0
        %769 = vmatpush1.msra.mxu0 %v750
        %770 = vmatprep.subr.mxu0 0.0
        %771 = vmatpush1.msra.mxu0 %v751
        %772 = vmatprep.subr.mxu0 0.0
        %773 = vmatpush1.msra.mxu0 %v752
        %774 = vmatprep.subr.mxu0 0.0
        %775 = vmatpush1.msra.mxu0 %v753
        %776 = vmatprep.subr.mxu0 0.0
        %777 = vmatpush1.msra.mxu0 %v754
        %778 = vmatprep.subr.mxu0 0.0
        %779 = vmatpush1.msra.mxu0 %v755
        %780 = vmatprep.subr.mxu0 0.0
        %781 = vmatpush1.msra.mxu0 %v756
        %782 = vmatprep.subr.mxu0 0.0
        %783 = vmatpush1.msra.mxu0 %v757
        %784 = vmatprep.subr.mxu0 0.0
        %785 = vmatpush1.msra.mxu0 %v758
        %786 = vmatprep.subr.mxu0 0.0
        %787 = vmatpush1.msra.mxu0 %v759
        %788 = vmatprep.subr.mxu0 0.0
        %789 = vmatpush1.msra.mxu0 %v760
        %790 = vmatprep.subr.mxu0 0.0
        %791 = vmatpush1.msra.mxu0 %v761
        %792 = vmatprep.subr.mxu0 0.0
        %793 = vmatpush1.msra.mxu0 %v762
        %794 = vmatprep.subr.mxu0 0.0
        %795 = vmatpush1.msra.mxu0 %v763
        %796 = vmatprep.subr.mxu0 0.0
        %797 = vmatpush1.msra.mxu0 0.0
        %798 = vmatprep.subr.mxu0 0.0
        %799 = vmatpush1.msra.mxu0 0.0
        %800 = vmatprep.subr.mxu0 0.0
        %801 = vmatpush1.msra.mxu0 0.0
        %802 = vmatprep.subr.mxu0 0.0
        %803 = vmatpush1.msra.mxu0 0.0
        %804 = vmatprep.subr.mxu0 0.0
        %805 = vmatpush1.msra.mxu0 0.0
        %806 = vmatprep.subr.mxu0 0.0
        %807 = vmatpush1.msra.mxu0 0.0
        %808 = vmatprep.subr.mxu0 0.0
        %809 = vmatpush1.msra.mxu0 0.0
        %810 = vmatprep.subr.mxu0 0.0
        %811 = vmatpush1.msra.mxu0 0.0
        %812 = vmatprep.subr.mxu0 0.0
        %813 = vmatpush1.msra.mxu0 0.0
        %814 = vmatprep.subr.mxu0 0.0
        %815 = vmatpush1.msra.mxu0 0.0
        %816 = vmatprep.subr.mxu0 0.0
        %817 = vmatpush1.msra.mxu0 0.0
        %818 = vmatprep.subr.mxu0 0.0
        %819 = vmatpush1.msra.mxu0 0.0
        %820 = vmatprep.subr.mxu0 0.0
        %821 = vmatpush1.msra.mxu0 0.0
        %822 = vmatprep.subr.mxu0 0.0
        %823 = vmatpush1.msra.mxu0 0.0
        %824 = vmatprep.subr.mxu0 0.0
        %825 = vmatpush1.msra.mxu0 0.0
        %826 = vmatprep.subr.mxu0 0.0
        %827 = vmatpush1.msra.mxu0 0.0
        %828 = vmatprep.mubr.f32.mxu0 0.0
        %829 = vmatmul.mubr.f32.gmra.mrb[0].mxu0 %v710
        %v830 = vpop.f32.mrb[0].mxu0
        %v831 = vadd.f32 0.0, %v830
        %v832 = vpop.f32.mrb[0].mxu0
        %833 = vdwg.mxu0
        %v834 = vmax.f32 %v831, 0.0
        %v835 = vld [vmem:[%s4] sm:$0xff]
        %836 = vmatprep.subr.mxu0 0.0
        %837 = vmatpush1.msra.mxu0 %v748
        %838 = vmatprep.subr.mxu0 0.0
        %839 = vmatpush1.msra.mxu0 %v749
        %840 = vmatprep.subr.mxu0 0.0
        %841 = vmatpush1.msra.mxu0 %v750
        %842 = vmatprep.subr.mxu0 0.0
        %843 = vmatpush1.msra.mxu0 %v751
        %844 = vmatprep.subr.mxu0 0.0
        %845 = vmatpush1.msra.mxu0 %v752
        %846 = vmatprep.subr.mxu0 0.0
        %847 = vmatpush1.msra.mxu0 %v753
        %848 = vmatprep.subr.mxu0 0.0
        %849 = vmatpush1.msra.mxu0 %v754
        %850 = vmatprep.subr.mxu0 0.0
        %851 = vmatpush1.msra.mxu0 %v755
        %852 = vmatprep.subr.mxu0 0.0
        %853 = vmatpush1.msra.mxu0 %v756
        %854 = vmatprep.subr.mxu0 0.0
        %855 = vmatpush1.msra.mxu0 %v757
        %856 = vmatprep.subr.mxu0 0.0
        %857 = vmatpush1.msra.mxu0 %v758
        %858 = vmatprep.subr.mxu0 0.0
        %859 = vmatpush1.msra.mxu0 %v759
        %860 = vmatprep.subr.mxu0 0.0
        %861 = vmatpush1.msra.mxu0 %v760
        %862 = vmatprep.subr.mxu0 0.0
        %863 = vmatpush1.msra.mxu0 %v761
        %864 = vmatprep.subr.mxu0 0.0
        %865 = vmatpush1.msra.mxu0 %v762
        %866 = vmatprep.subr.mxu0 0.0
        %867 = vmatpush1.msra.mxu0 %v763
        %868 = vmatprep.subr.mxu0 0.0
        %869 = vmatpush1.msra.mxu0 0.0
        %870 = vmatprep.subr.mxu0 0.0
        %871 = vmatpush1.msra.mxu0 0.0
        %872 = vmatprep.subr.mxu0 0.0
        %873 = vmatpush1.msra.mxu0 0.0
        %874 = vmatprep.subr.mxu0 0.0
        %875 = vmatpush1.msra.mxu0 0.0
        %876 = vmatprep.subr.mxu0 0.0
        %877 = vmatpush1.msra.mxu0 0.0
        %878 = vmatprep.subr.mxu0 0.0
        %879 = vmatpush1.msra.mxu0 0.0
        %880 = vmatprep.subr.mxu0 0.0
        %881 = vmatpush1.msra.mxu0 0.0
        %882 = vmatprep.subr.mxu0 0.0
        %883 = vmatpush1.msra.mxu0 0.0
        %884 = vmatprep.subr.mxu0 0.0
        %885 = vmatpush1.msra.mxu0 0.0
        %886 = vmatprep.subr.mxu0 0.0
        %887 = vmatpush1.msra.mxu0 0.0
        %888 = vmatprep.subr.mxu0 0.0
        %889 = vmatpush1.msra.mxu0 0.0
        %890 = vmatprep.subr.mxu0 0.0
        %891 = vmatpush1.msra.mxu0 0.0
        %892 = vmatprep.subr.mxu0 0.0
        %893 = vmatpush1.msra.mxu0 0.0
        %894 = vmatprep.subr.mxu0 0.0
        %895 = vmatpush1.msra.mxu0 0.0
        %896 = vmatprep.subr.mxu0 0.0
        %897 = vmatpush1.msra.mxu0 0.0
        %898 = vmatprep.subr.mxu0 0.0
        %899 = vmatpush1.msra.mxu0 0.0
        %900 = vmatprep.mubr.f32.mxu0 0.0
        %901 = vmatmul.mubr.f32.gmra.mrb[0].mxu0 %v747
        %v902 = vpop.f32.mrb[0].mxu0
        %v903 = vadd.f32 0.0, %v902
        %v904 = vpop.f32.mrb[0].mxu0
        %905 = vdwg.mxu0
        %v906 = vmax.f32 %v903, 0.0
        %vm907 = vcmask 64512
        %v909 = vsel %vm907, %v906, 0
        %911 = vmatprep.subr.mxu0 0.0
        %912 = vmatpush1.msra.mxu0 %v835
        %913 = vmatprep.subr.mxu0 0.0
        %914 = vmatpush1.msra.mxu0 0.0
        %915 = vmatprep.subr.mxu0 0.0
        %916 = vmatpush1.msra.mxu0 0.0
        %917 = vmatprep.subr.mxu0 0.0
        %918 = vmatpush1.msra.mxu0 0.0
        %919 = vmatprep.subr.mxu0 0.0
        %920 = vmatpush1.msra.mxu0 0.0
        %921 = vmatprep.subr.mxu0 0.0
        %922 = vmatpush1.msra.mxu0 0.0
        %923 = vmatprep.subr.mxu0 0.0
        %924 = vmatpush1.msra.mxu0 0.0
        %925 = vmatprep.subr.mxu0 0.0
        %926 = vmatpush1.msra.mxu0 0.0
        %927 = vmatprep.subr.mxu0 0.0
        %928 = vmatpush1.msra.mxu0 0.0
        %929 = vmatprep.subr.mxu0 0.0
        %930 = vmatpush1.msra.mxu0 0.0
        %931 = vmatprep.subr.mxu0 0.0
        %932 = vmatpush1.msra.mxu0 0.0
        %933 = vmatprep.subr.mxu0 0.0
        %934 = vmatpush1.msra.mxu0 0.0
        %935 = vmatprep.subr.mxu0 0.0
        %936 = vmatpush1.msra.mxu0 0.0
        %937 = vmatprep.subr.mxu0 0.0
        %938 = vmatpush1.msra.mxu0 0.0
        %939 = vmatprep.subr.mxu0 0.0
        %940 = vmatpush1.msra.mxu0 0.0
        %941 = vmatprep.subr.mxu0 0.0
        %942 = vmatpush1.msra.mxu0 0.0
        %943 = vmatprep.subr.mxu0 0.0
        %944 = vmatpush1.msra.mxu0 0.0
        %945 = vmatprep.subr.mxu0 0.0
        %946 = vmatpush1.msra.mxu0 0.0
        %947 = vmatprep.subr.mxu0 0.0
        %948 = vmatpush1.msra.mxu0 0.0
        %949 = vmatprep.subr.mxu0 0.0
        %950 = vmatpush1.msra.mxu0 0.0
        %951 = vmatprep.subr.mxu0 0.0
        %952 = vmatpush1.msra.mxu0 0.0
        %953 = vmatprep.subr.mxu0 0.0
        %954 = vmatpush1.msra.mxu0 0.0
        %955 = vmatprep.subr.mxu0 0.0
        %956 = vmatpush1.msra.mxu0 0.0
        %957 = vmatprep.subr.mxu0 0.0
        %958 = vmatpush1.msra.mxu0 0.0
        %959 = vmatprep.subr.mxu0 0.0
        %960 = vmatpush1.msra.mxu0 0.0
        %961 = vmatprep.subr.mxu0 0.0
        %962 = vmatpush1.msra.mxu0 0.0
        %963 = vmatprep.subr.mxu0 0.0
        %964 = vmatpush1.msra.mxu0 0.0
        %965 = vmatprep.subr.mxu0 0.0
        %966 = vmatpush1.msra.mxu0 0.0
        %967 = vmatprep.subr.mxu0 0.0
        %968 = vmatpush1.msra.mxu0 0.0
        %969 = vmatprep.subr.mxu0 0.0
        %970 = vmatpush1.msra.mxu0 0.0
        %971 = vmatprep.subr.mxu0 0.0
        %972 = vmatpush1.msra.mxu0 0.0
        %973 = vmatprep.subr.mxu0 0.0
        %974 = vmatpush1.msra.mxu0 0.0
        %975 = vmatprep.mubr.f32.mxu0 0.0
        %976 = vmatmul.mubr.f32.gmra.mrb[0].mxu0 %v909
        %v977 = vpop.f32.mrb[0].mxu0
        %v978 = vadd.f32 0.0, %v977
        %v979 = vpop.f32.mrb[0].mxu0
        %980 = vdwg.mxu0
        %v982 = vsel %vm907, %v834, 0
        %984 = vmatprep.subr.mxu0 0.0
        %985 = vmatpush1.msra.mxu0 %v835
        %986 = vmatprep.subr.mxu0 0.0
        %987 = vmatpush1.msra.mxu0 0.0
        %988 = vmatprep.subr.mxu0 0.0
        %989 = vmatpush1.msra.mxu0 0.0
        %990 = vmatprep.subr.mxu0 0.0
        %991 = vmatpush1.msra.mxu0 0.0
        %992 = vmatprep.subr.mxu0 0.0
        %993 = vmatpush1.msra.mxu0 0.0
        %994 = vmatprep.subr.mxu0 0.0
        %995 = vmatpush1.msra.mxu0 0.0
        %996 = vmatprep.subr.mxu0 0.0
        %997 = vmatpush1.msra.mxu0 0.0
        %998 = vmatprep.subr.mxu0 0.0
        %999 = vmatpush1.msra.mxu0 0.0
        %1000 = vmatprep.subr.mxu0 0.0
        %1001 = vmatpush1.msra.mxu0 0.0
        %1002 = vmatprep.subr.mxu0 0.0
        %1003 = vmatpush1.msra.mxu0 0.0
        %1004 = vmatprep.subr.mxu0 0.0
        %1005 = vmatpush1.msra.mxu0 0.0
        %1006 = vmatprep.subr.mxu0 0.0
        %1007 = vmatpush1.msra.mxu0 0.0
        %1008 = vmatprep.subr.mxu0 0.0
        %1009 = vmatpush1.msra.mxu0 0.0
        %1010 = vmatprep.subr.mxu0 0.0
        %1011 = vmatpush1.msra.mxu0 0.0
        %1012 = vmatprep.subr.mxu0 0.0
        %1013 = vmatpush1.msra.mxu0 0.0
        %1014 = vmatprep.subr.mxu0 0.0
        %1015 = vmatpush1.msra.mxu0 0.0
        %1016 = vmatprep.subr.mxu0 0.0
        %1017 = vmatpush1.msra.mxu0 0.0
        %1018 = vmatprep.subr.mxu0 0.0
        %1019 = vmatpush1.msra.mxu0 0.0
        %1020 = vmatprep.subr.mxu0 0.0
        %1021 = vmatpush1.msra.mxu0 0.0
        %1022 = vmatprep.subr.mxu0 0.0
        %1023 = vmatpush1.msra.mxu0 0.0
        %1024 = vmatprep.subr.mxu0 0.0
        %1025 = vmatpush1.msra.mxu0 0.0
        %1026 = vmatprep.subr.mxu0 0.0
        %1027 = vmatpush1.msra.mxu0 0.0
        %1028 = vmatprep.subr.mxu0 0.0
        %1029 = vmatpush1.msra.mxu0 0.0
        %1030 = vmatprep.subr.mxu0 0.0
        %1031 = vmatpush1.msra.mxu0 0.0
        %1032 = vmatprep.subr.mxu0 0.0
        %1033 = vmatpush1.msra.mxu0 0.0
        %1034 = vmatprep.subr.mxu0 0.0
        %1035 = vmatpush1.msra.mxu0 0.0
        %1036 = vmatprep.subr.mxu0 0.0
        %1037 = vmatpush1.msra.mxu0 0.0
        %1038 = vmatprep.subr.mxu0 0.0
        %1039 = vmatpush1.msra.mxu0 0.0
        %1040 = vmatprep.subr.mxu0 0.0
        %1041 = vmatpush1.msra.mxu0 0.0
        %1042 = vmatprep.subr.mxu0 0.0
        %1043 = vmatpush1.msra.mxu0 0.0
        %1044 = vmatprep.subr.mxu0 0.0
        %1045 = vmatpush1.msra.mxu0 0.0
        %1046 = vmatprep.subr.mxu0 0.0
        %1047 = vmatpush1.msra.mxu0 0.0
        %1048 = vmatprep.mubr.f32.mxu0 0.0
        %1049 = vmatmul.mubr.f32.gmra.mrb[0].mxu0 %v982
        %v1050 = vpop.f32.mrb[0].mxu0
        %v1051 = vadd.f32 %v978, %v1050
        %v1052 = vpop.f32.mrb[0].mxu0
        %1053 = vdwg.mxu0
        %v1054 = vsub.f32 0.0, %v1051
        %v1055 = vmul.f32 %v1054, 1.442695
        %v1056 = vpow.pop %v1055
        %v1057 = vadd.f32 %v1056, 1.0
        %v1058 = vrcp.pop %v1057
        %v1059 = vmul.f32 1.0, %v1058
        %1060 = vst [vmem:[%s274] sm:$0x1] %v1059
        %vm1061 = vcmask 1040384
        %v1062 = vsel %vm1061, %v1059, 0.0
        %1063 = vadd.xlane.f32.xlu0 %v1062
        %v1064 = vpop.xlane.xlu0 %1063
        %v1065 = vrcp.pop 128.0
        %v1066 = vmul.f32 %v1064, %v1065
        %v1067 = vsel %vm1061, %v1059, -inf
        %1068 = vmax.xlane.f32.xlu0 %v1067
        %v1069 = vpop.xlane.xlu0 %1068
        %v1070 = vld [vmem:[%s5] sm:$0x1]
        %v1071 = vmul.f32 %v1066, %v1070
        %v1073 = vlaneseq
        %v1074 = vshrl.u32 %v1073, 7
        %v1075 = vsub.s32 0, %v1074
        %v1076 = vrot.slane %v1070, %v1075
        %1077 = vrot.lane.b32.xlu0 %v1076, 127
        %v1078 = vpop.permute.xlu0 %1077
        %v1080 = vmul.f32 %v1069, %v1078
        %v1081 = vadd.f32 %v1071, %v1080
        %v1082 = vsub.f32 0.0, %v1081
        %v1083 = vmul.f32 %v1082, 1.442695
        %v1084 = vpow.pop %v1083
        %v1085 = vadd.f32 %v1084, 1.0
        %v1086 = vrcp.pop %v1085
        %v1087 = vmul.f32 1.0, %v1086
        %1089 = vset.pattern.permute.xlu0 0
        %1090 = vperm.xlu0 %1089, %v1087
        %v1091 = vpop.permute.xlu0 %1090
        %1093 = vst [vmem:[%s280] sm:$0x1] %v1091
        %s1094 = sand.u32 %s164, 1
        %s1095 = scalar_lea.sflag [#allocation3], %s1094
        %s1096 = sand.u32 %s164, 1
        %s1097 = scalar_lea.vmem [#allocation2], %s1096
        %s1098 = sand.u32 %s190, 1
        %s1099 = scalar_lea.sflag [#allocation5], %s1098
        %s1100 = sand.u32 %s190, 1
        %s1101 = scalar_lea.vmem [#allocation4], %s1100
        // Predicated region
        $region45: #{tpu_custom_call.1} parent=43 // pred_check
          %p1102 = pneg %p174
        $region46: #{tpu_custom_call.1} parent=43 // pred_check_branch
          %1104 = sbr.rel (%p1102) target = $region48
        $region47: #{tpu_custom_call.1} parent=43 // pred_region
          %s1106 = ssub.s32 16, 16
          %1107 = vsyncadd %s1095, %s1106
          %s1108 = smul.addr %s25, 16
          %s1109 = scalar_lea.hbm %s6, %s1108
          %s1111 = sshll.u32 %s1097, 4
          %s1112 = int_to_ptr.vmem [resolvable:$true] %s1111
          %1114 = dma.vmem_to_hbm [thread:$0]  %s1112, 16, %s1109, %s1095
        $region48: #{tpu_custom_call.1} parent=43 // pred_fallthru
          _
        // Predicated region
        $region49: #{tpu_custom_call.1} parent=43 // pred_check
          %p1115 = pneg %p200
        $region50: #{tpu_custom_call.1} parent=43 // pred_check_branch
          %1117 = sbr.rel (%p1115) target = $region52
        $region51: #{tpu_custom_call.1} parent=43 // pred_region
          %s1119 = ssub.s32 16, 16
          %1120 = vsyncadd %s1099, %s1119
          %s1121 = smul.addr %s25, 16
          %s1122 = scalar_lea.hbm %s7, %s1121
          %s1124 = sshll.u32 %s1101, 4
          %s1125 = int_to_ptr.vmem [resolvable:$true] %s1124
          %1127 = dma.vmem_to_hbm [thread:$0]  %s1125, 16, %s1122, %s1099
        $region52: #{tpu_custom_call.1} parent=43 // pred_fallthru
          _
      $region44: #{tpu_custom_call.1} parent=5 // pred_fallthru
        _
      %p1128 = scmp.le.s32.totalorder 2, %s20
      // Predicated region
      $region53: #{tpu_custom_call.1} parent=5 // pred_check
        %p1129 = pneg %p1128
      $region54: #{tpu_custom_call.1} parent=5 // pred_check_branch
        %1131 = sbr.rel (%p1129) target = $region56
      $region55: #{tpu_custom_call.1} parent=5 // pred_region
        %s1132 = ssub.s32 %s20, 2
        // Predicated region
        $region57: #{tpu_custom_call.1} parent=55 // pred_check
          %p1133 = pneg %p180
        $region58: #{tpu_custom_call.1} parent=55 // pred_check_branch
          %1135 = sbr.rel (%p1133) target = $region60
        $region59: #{tpu_custom_call.1} parent=55 // pred_region
          %s1136 = sand.u32 %s165, 1
          %s1137 = scalar_lea.sflag [#allocation3], %s1136
          %s1138 = sand.u32 %s165, 1
          %s1139 = scalar_lea.vmem [#allocation2], %s1138
          %1140 = dma.done %s1137, 16
        $region60: #{tpu_custom_call.1} parent=55 // pred_fallthru
          _
        // Predicated region
        $region61: #{tpu_custom_call.1} parent=55 // pred_check
          %p1141 = pneg %p206
        $region62: #{tpu_custom_call.1} parent=55 // pred_check_branch
          %1143 = sbr.rel (%p1141) target = $region64
        $region63: #{tpu_custom_call.1} parent=55 // pred_region
          %s1144 = sand.u32 %s191, 1
          %s1145 = scalar_lea.sflag [#allocation5], %s1144
          %s1146 = sand.u32 %s191, 1
          %s1147 = scalar_lea.vmem [#allocation4], %s1146
          %1148 = dma.done %s1145, 16
        $region64: #{tpu_custom_call.1} parent=55 // pred_fallthru
          _
      $region56: #{tpu_custom_call.1} parent=5 // pred_fallthru
        _
    $region6: #{tpu_custom_call.1} parent=1 // loop_footer
      %s24 = sadd.s32 1, %s20
    $region7: #{tpu_custom_call.1} parent=1 // loop_footer_branch
      %19 = sbr.rel target = $region3
    $region8: #{tpu_custom_call.1} parent=1 // loop_exit
      _
    %1149 = vsyncpa [#allocation3], 1
    %s1150 = scalar_lea.sflag [#allocation3], 1
    %1151 = vsyncpa %s1150, 1
    %1152 = vsyncpa [#allocation5], 1
    %s1153 = scalar_lea.sflag [#allocation5], 1
    %1154 = vsyncpa %s1153, 1

</llo_original>
